<compile_context>
chip_gen: v7x
topology: tpu7x:2x2x1
jax: 0.10.0
libtpu: 0.0.40
codegen_flags: <defaults>
</compile_context>

<pallas_src>
import jax
import jax.numpy as jnp
from jax.experimental import pallas as pl
from jax.experimental.pallas import tpu as pltpu


_VMEM_LIMIT_BYTES = 48 * 1024 * 1024   # explicit scoped limit (v5e default is only 16 MiB)
_VMEM_BUDGET_BYTES = 40 * 1024 * 1024  # target for double-buffered blocks + scratch


def distmult_kernel(c_ref, node_i_ref, node_j_ref, w_ref, out_ref, scaled_ref):
    # Grid = (B, I, J); every step writes a distinct (1, R, tn, tn) output block.
    b = pl.program_id(0)
    j = pl.program_id(2)
    num_rel = out_ref.shape[1]

    # Hoist the per-destination-tile scaling out of the J sweep: (ni * w_r) depends only
    # on (b, i, r), so compute it once at j == 0 and stash it in VMEM scratch.
    @pl.when(j == 0)
    def _():
        ni = node_i_ref[0].astype(jnp.float32)               # [tn, E] scale in f32 (v5e-safe VPU)
        for r in range(num_rel):                             # static unrolled loop over relations
            w_r = w_ref[pl.ds(r, 1), :]                      # [1, E] static row of the resident stack
            scaled_ref[r] = (ni * w_r).astype(scaled_ref.dtype)

    nj = node_j_ref[0]                                       # [tn, E] source-node tile (bf16)
    for r in range(num_rel):
        # (ni * w_r) @ nj^T on the MXU, f32 accumulation.
        logits = jax.lax.dot_general(
            scaled_ref[r], nj,
            dimension_numbers=(((1,), (1,)), ((), ())),
            preferred_element_type=jnp.float32,
        )                                                    # [tn, tn]
        logits = logits + c_ref[b, r]                        # per-(b, r) constant from SMEM (scalar path)
        # sigmoid = 1 / (1 + exp(-x)) with EUP exp + approx reciprocal (no exact f32 divide).
        e = jnp.exp(-logits)
        out_ref[0, r] = pl.reciprocal(1.0 + e, approx=True).astype(out_ref.dtype)


def _choose_tile(n, num_rel, e_dim, out_bytes, in_bytes):
    """Pad N to a lane-dense multiple of 128 and pick the largest node tile in
    {512, 256, 128} dividing the padded N that keeps the VMEM footprint in budget."""
    n_pad = ((n + 127) // 128) * 128
    for tn in (512, 256, 128):
        if n_pad % tn:
            continue
        need = (2 * num_rel * tn * tn * out_bytes    # output block, double-buffered
                + 4 * tn * e_dim * in_bytes          # two node tiles, double-buffered
                + 2 * num_rel * e_dim * 4            # resident f32 weight stack
                + num_rel * tn * e_dim * in_bytes)   # hoisted scaled-node scratch
        if need <= _VMEM_BUDGET_BYTES:
            return tn, n_pad
    return 128, n_pad                                # best effort for pathologically large R*E


def relational_distmult(node_encodings, relation_encodings, weights, *,
                        out_dtype=None, compute_dtype=jnp.bfloat16):
    """node_encodings [B, N, E], relation_encodings [B, R, Dr], weights [R, E + Dr]
    (torch Parameter; concat order is [node, relation], so the first E entries of each
    row scale entity dims and the last Dr scale relation dims).

    out_dtype: output dtype (default: node_encodings.dtype). Pass jnp.bfloat16 to halve
               the HBM writeback (the kernel is write-bound).
    compute_dtype: dtype of the node tiles / MXU operands (f32 accumulation always).
                   Pass jnp.float32 if strict f32 parity with torch is required.
    """
    B, N, E = node_encodings.shape
    _, R, Dr = relation_encodings.shape
    assert weights.shape == (R, E + Dr)
    out_dtype = node_encodings.dtype if out_dtype is None else out_dtype

    w_node = weights[:, :E].astype(jnp.float32)               # [R, E]  entity-dim scales
    w_rel = weights[:, E:].astype(jnp.float32)                # [R, Dr] relation-dim scales

    # Relation contribution collapses to a scalar per (b, r); precompute in the wrapper
    # so the kernel never touches relation_encodings.
    rel_f32 = relation_encodings.astype(jnp.float32)
    c = jnp.einsum("brd,rd->br", rel_f32 * rel_f32, w_rel)    # [B, R] f32 -> SMEM

    out_bytes = jnp.dtype(out_dtype).itemsize
    in_bytes = jnp.dtype(compute_dtype).itemsize
    tn, n_pad = _choose_tile(N, R, E, out_bytes, in_bytes)

    nodes = node_encodings.astype(compute_dtype)              # bf16 tiles: halves node HBM reads
    if n_pad != N:
        nodes = jnp.pad(nodes, ((0, 0), (0, n_pad - N), (0, 0)))

    nblk = n_pad // tn
    grid = (B, nblk, nblk)

    out = pl.pallas_call(
        distmult_kernel,
        out_shape=jax.ShapeDtypeStruct((B, R, n_pad, n_pad), out_dtype),
        grid_spec=pltpu.PrefetchScalarGridSpec(
            num_scalar_prefetch=0,
            grid=grid,
            in_specs=[
                # per-(b, r) relation constants, whole [B, R] array on the scalar path
                pl.BlockSpec(memory_space=pltpu.MemorySpace.SMEM),
                # dst-node tile (varies with b, i)
                pl.BlockSpec((1, tn, E), lambda b, i, j: (b, i, 0)),
                # src-node tile (varies with b, j)
                pl.BlockSpec((1, tn, E), lambda b, i, j: (b, j, 0)),
                # full per-relation weight stack, resident in VMEM (constant block index)
                pl.BlockSpec((R, E), lambda b, i, j: (0, 0)),
            ],
            # R folded into the output block: one lane-dense (1, R, tn, tn) slab per step.
            out_specs=pl.BlockSpec((1, R, tn, tn), lambda b, i, j: (b, 0, i, j)),
            # Hoisted (ni * w_r) tiles, reused across the whole J sweep.
            scratch_shapes=[pltpu.VMEM((R, tn, E), compute_dtype)],
        ),
        compiler_params=pltpu.CompilerParams(
            # J must be "arbitrary" (scratch carries state across the J sweep); B and I are
            # parallel so v7x's two TensorCores split the work.
            dimension_semantics=("parallel", "parallel", "arbitrary"),
            vmem_limit_bytes=_VMEM_LIMIT_BYTES,
        ),
    )(c, nodes, nodes, w_node)

    if n_pad != N:
        out = out[:, :, :N, :N]
    return out


def _reference(node_encodings, relation_encodings, weights):
    """Faithful f32 translation of the torch forward (concat + diag + matmuls)."""
    B, N, E = node_encodings.shape
    _, R, Dr = relation_encodings.shape
    outs = []
    for r in range(R):
        rel = jnp.broadcast_to(relation_encodings[:, r][:, None, :], (B, N, Dr))
        x = jnp.concatenate([node_encodings, rel], axis=-1)          # [B, N, E+Dr]
        w2d = jnp.diag(weights[r])                                   # [E+Dr, E+Dr]
        head = jnp.matmul(x, w2d)                                    # [B, N, E+Dr]
        tail = jnp.matmul(head, jnp.transpose(x, (0, 2, 1)))         # [B, N, N]
        outs.append(jax.nn.sigmoid(tail))
    return jnp.stack(outs, axis=1)                                   # [B, R, N, N]


if __name__ == "__main__":
    key = jax.random.PRNGKey(0)
    B, N = 2, 8
    E, Dr, R = 16, 8, 3

    k1, k2, k3 = jax.random.split(key, 3)
    node_encodings = jax.random.normal(k1, (B, N, E), dtype=jnp.float32)
    relation_encodings = jax.random.normal(k2, (B, R, Dr), dtype=jnp.float32)

    # Deterministic xavier_uniform init for Parameter([R, Dr+E]).
    fan_out, fan_in = R, E + Dr
    limit = (6.0 / (fan_in + fan_out)) ** 0.5
    weights = jax.random.uniform(k3, (R, E + Dr), minval=-limit, maxval=limit,
                                 dtype=jnp.float32)

    ref = _reference(node_encodings, relation_encodings, weights)

    # Default: output dtype inherits the input dtype (module semantics preserved).
    out = relational_distmult(node_encodings, relation_encodings, weights)
    out = jax.block_until_ready(out)
    assert out.shape == (B, R, N, N)
    assert out.dtype == node_encodings.dtype
    # bf16 MXU operands + post-sigmoid squashing -> errors well under 1e-2.
    assert jnp.allclose(out, ref, atol=2e-2, rtol=2e-2), float(jnp.max(jnp.abs(out - ref)))

    # Performance path: bf16 output (halves HBM writeback on this write-bound kernel).
    out_bf16 = relational_distmult(node_encodings, relation_encodings, weights,
                                   out_dtype=jnp.bfloat16)
    out_bf16 = jax.block_until_ready(out_bf16)
    assert out_bf16.dtype == jnp.bfloat16
    assert jnp.allclose(out_bf16.astype(jnp.float32), ref, atol=3e-2, rtol=3e-2), \
        float(jnp.max(jnp.abs(out_bf16.astype(jnp.float32) - ref)))

    print("KERNEL_OK")
</pallas_src>

<mosaic_0001>
module attributes {stable_mosaic.version = 11 : i64} {
  func.func @distmult_kernel(%arg0: i32, %arg1: i32, %arg2: i32, %arg3: memref<2x3xf32, #tpu.memory_space<smem>>, %arg4: memref<1x128x16xbf16, #tpu.memory_space<vmem>>, %arg5: memref<1x128x16xbf16, #tpu.memory_space<vmem>>, %arg6: memref<3x16xf32, #tpu.memory_space<vmem>>, %arg7: memref<1x3x128x128xf32, #tpu.memory_space<vmem>>, %arg8: memref<3x128x16xbf16, #tpu.memory_space<vmem>>) attributes {dimension_semantics = [#tpu.dimension_semantics<parallel>, #tpu.dimension_semantics<parallel>, #tpu.dimension_semantics<arbitrary>], iteration_bounds = array<i64: 2, 1, 1>, scalar_prefetch = 0 : i64, scratch_operands = 1 : i64, tpu.core_type = #tpu.core_type<tc>, window_params = [{transform_indices = @transform_0, window_bounds = array<i64: 2, 3>}, {transform_indices = @transform_1, window_bounds = array<i64: 1, 128, 16>}, {transform_indices = @transform_2, window_bounds = array<i64: 1, 128, 16>}, {pipeline_mode = #tpu.pipeline_mode<synchronous>, transform_indices = @transform_3, window_bounds = array<i64: 3, 16>}, {transform_indices = @transform_4, window_bounds = array<i64: 1, 3, 128, 128>}]} {
    %c0_i32 = arith.constant 0 : i32
    %0 = arith.cmpi eq, %arg2, %c0_i32 : i32
    %1 = arith.extui %0 : i1 to i32
    %c0_i32_0 = arith.constant 0 : i32
    %2 = arith.cmpi ne, %1, %c0_i32_0 : i32
    scf.if %2 {
      %c0_33 = arith.constant 0 : index
      %c0_34 = arith.constant 0 : index
      %c0_35 = arith.constant 0 : index
      %53 = vector.load %arg4[%c0_33, %c0_34, %c0_35] : memref<1x128x16xbf16, #tpu.memory_space<vmem>>, vector<1x128x16xbf16>
      %54 = vector.shape_cast %53 : vector<1x128x16xbf16> to vector<128x16xbf16>
      %55 = arith.extf %54 : vector<128x16xbf16> to vector<128x16xf32>
      %c0_36 = arith.constant 0 : index
      %c0_37 = arith.constant 0 : index
      %56 = vector.load %arg6[%c0_36, %c0_37] : memref<3x16xf32, #tpu.memory_space<vmem>>, vector<1x16xf32>
      %57 = vector.broadcast %56 : vector<1x16xf32> to vector<128x16xf32>
      %58 = arith.mulf %55, %57 : vector<128x16xf32>
      %59 = arith.truncf %58 : vector<128x16xf32> to vector<128x16xbf16>
      %c0_38 = arith.constant 0 : index
      %c0_39 = arith.constant 0 : index
      %c0_40 = arith.constant 0 : index
      %60 = vector.load %arg8[%c0_38, %c0_39, %c0_40] : memref<3x128x16xbf16, #tpu.memory_space<vmem>>, vector<1x128x16xbf16>
      %61 = vector.shape_cast %60 : vector<1x128x16xbf16> to vector<128x16xbf16>
      %62 = vector.shape_cast %59 : vector<128x16xbf16> to vector<1x128x16xbf16>
      tpu.vector_store %arg8[%c0_38, %c0_39, %c0_40], %62 {strides = array<i32>} : memref<3x128x16xbf16, #tpu.memory_space<vmem>>, vector<1x128x16xbf16>,
      %c1_41 = arith.constant 1 : index
      %c0_42 = arith.constant 0 : index
      %63 = vector.load %arg6[%c1_41, %c0_42] : memref<3x16xf32, #tpu.memory_space<vmem>>, vector<1x16xf32>
      %64 = vector.broadcast %63 : vector<1x16xf32> to vector<128x16xf32>
      %65 = arith.mulf %55, %64 : vector<128x16xf32>
      %66 = arith.truncf %65 : vector<128x16xf32> to vector<128x16xbf16>
      %c1_43 = arith.constant 1 : index
      %c0_44 = arith.constant 0 : index
      %c0_45 = arith.constant 0 : index
      %67 = vector.load %arg8[%c1_43, %c0_44, %c0_45] : memref<3x128x16xbf16, #tpu.memory_space<vmem>>, vector<1x128x16xbf16>
      %68 = vector.shape_cast %67 : vector<1x128x16xbf16> to vector<128x16xbf16>
      %69 = vector.shape_cast %66 : vector<128x16xbf16> to vector<1x128x16xbf16>
      tpu.vector_store %arg8[%c1_43, %c0_44, %c0_45], %69 {strides = array<i32>} : memref<3x128x16xbf16, #tpu.memory_space<vmem>>, vector<1x128x16xbf16>,
      %c2_46 = arith.constant 2 : index
      %c0_47 = arith.constant 0 : index
      %70 = vector.load %arg6[%c2_46, %c0_47] : memref<3x16xf32, #tpu.memory_space<vmem>>, vector<1x16xf32>
      %71 = vector.broadcast %70 : vector<1x16xf32> to vector<128x16xf32>
      %72 = arith.mulf %55, %71 : vector<128x16xf32>
      %73 = arith.truncf %72 : vector<128x16xf32> to vector<128x16xbf16>
      %c2_48 = arith.constant 2 : index
      %c0_49 = arith.constant 0 : index
      %c0_50 = arith.constant 0 : index
      %74 = vector.load %arg8[%c2_48, %c0_49, %c0_50] : memref<3x128x16xbf16, #tpu.memory_space<vmem>>, vector<1x128x16xbf16>
      %75 = vector.shape_cast %74 : vector<1x128x16xbf16> to vector<128x16xbf16>
      %76 = vector.shape_cast %73 : vector<128x16xbf16> to vector<1x128x16xbf16>
      tpu.vector_store %arg8[%c2_48, %c0_49, %c0_50], %76 {strides = array<i32>} : memref<3x128x16xbf16, #tpu.memory_space<vmem>>, vector<1x128x16xbf16>,
    } else {
    }
    %c0 = arith.constant 0 : index
    %c0_1 = arith.constant 0 : index
    %c0_2 = arith.constant 0 : index
    %3 = vector.load %arg5[%c0, %c0_1, %c0_2] : memref<1x128x16xbf16, #tpu.memory_space<vmem>>, vector<1x128x16xbf16>
    %4 = vector.shape_cast %3 : vector<1x128x16xbf16> to vector<128x16xbf16>
    %c0_3 = arith.constant 0 : index
    %c0_4 = arith.constant 0 : index
    %c0_5 = arith.constant 0 : index
    %5 = vector.load %arg8[%c0_3, %c0_4, %c0_5] : memref<3x128x16xbf16, #tpu.memory_space<vmem>>, vector<1x128x16xbf16>
    %6 = vector.shape_cast %5 : vector<1x128x16xbf16> to vector<128x16xbf16>
    %cst = arith.constant dense<0.000000e+00> : vector<128x128xf32>
    %7 = tpu.matmul %6, %4, %cst {dimension_numbers = #tpu.dot_dimension_numbers<[1], [1], [0], [0], [0, 0, 1, 0], [], []>} : vector<128x16xbf16>, vector<128x16xbf16>, vector<128x128xf32> -> vector<128x128xf32>
    %8 = arith.index_cast %arg0 : i32 to index
    %c0_6 = arith.constant 0 : index
    %9 = memref.load %arg3[%8, %c0_6] : memref<2x3xf32, #tpu.memory_space<smem>>
    %10 = vector.broadcast %9 : f32 to vector<128x128xf32>
    %11 = arith.addf %7, %10 : vector<128x128xf32>
    %cst_7 = arith.constant 0.000000e+00 : f32
    %12 = vector.broadcast %cst_7 : f32 to vector<128x128xf32>
    %13 = arith.subf %12, %11 : vector<128x128xf32>
    %14 = math.exp %13 : vector<128x128xf32>
    %cst_8 = arith.constant 1.000000e+00 : f32
    %15 = vector.broadcast %cst_8 : f32 to vector<128x128xf32>
    %16 = arith.addf %15, %14 : vector<128x128xf32>
    %17 = tpu.reciprocal %16 {approx = true} : vector<128x128xf32> -> vector<128x128xf32>
    %c0_9 = arith.constant 0 : index
    %c0_10 = arith.constant 0 : index
    %c0_11 = arith.constant 0 : index
    %c0_12 = arith.constant 0 : index
    %18 = vector.load %arg7[%c0_9, %c0_10, %c0_11, %c0_12] : memref<1x3x128x128xf32, #tpu.memory_space<vmem>>, vector<1x1x128x128xf32>
    %19 = vector.shape_cast %18 : vector<1x1x128x128xf32> to vector<128x128xf32>
    %20 = vector.shape_cast %17 : vector<128x128xf32> to vector<1x1x128x128xf32>
    tpu.vector_store %arg7[%c0_9, %c0_10, %c0_11, %c0_12], %20 {strides = array<i32>} : memref<1x3x128x128xf32, #tpu.memory_space<vmem>>, vector<1x1x128x128xf32>,
    %c1 = arith.constant 1 : index
    %c0_13 = arith.constant 0 : index
    %c0_14 = arith.constant 0 : index
    %21 = vector.load %arg8[%c1, %c0_13, %c0_14] : memref<3x128x16xbf16, #tpu.memory_space<vmem>>, vector<1x128x16xbf16>
    %22 = vector.shape_cast %21 : vector<1x128x16xbf16> to vector<128x16xbf16>
    %cst_15 = arith.constant dense<0.000000e+00> : vector<128x128xf32>
    %23 = tpu.matmul %22, %4, %cst_15 {dimension_numbers = #tpu.dot_dimension_numbers<[1], [1], [0], [0], [0, 0, 1, 0], [], []>} : vector<128x16xbf16>, vector<128x16xbf16>, vector<128x128xf32> -> vector<128x128xf32>
    %24 = arith.index_cast %arg0 : i32 to index
    %c1_16 = arith.constant 1 : index
    %25 = memref.load %arg3[%24, %c1_16] : memref<2x3xf32, #tpu.memory_space<smem>>
    %26 = vector.broadcast %25 : f32 to vector<128x128xf32>
    %27 = arith.addf %23, %26 : vector<128x128xf32>
    %cst_17 = arith.constant 0.000000e+00 : f32
    %28 = vector.broadcast %cst_17 : f32 to vector<128x128xf32>
    %29 = arith.subf %28, %27 : vector<128x128xf32>
    %30 = math.exp %29 : vector<128x128xf32>
    %cst_18 = arith.constant 1.000000e+00 : f32
    %31 = vector.broadcast %cst_18 : f32 to vector<128x128xf32>
    %32 = arith.addf %31, %30 : vector<128x128xf32>
    %33 = tpu.reciprocal %32 {approx = true} : vector<128x128xf32> -> vector<128x128xf32>
    %c0_19 = arith.constant 0 : index
    %c1_20 = arith.constant 1 : index
    %c0_21 = arith.constant 0 : index
    %c0_22 = arith.constant 0 : index
    %34 = vector.load %arg7[%c0_19, %c1_20, %c0_21, %c0_22] : memref<1x3x128x128xf32, #tpu.memory_space<vmem>>, vector<1x1x128x128xf32>
    %35 = vector.shape_cast %34 : vector<1x1x128x128xf32> to vector<128x128xf32>
    %36 = vector.shape_cast %33 : vector<128x128xf32> to vector<1x1x128x128xf32>
    tpu.vector_store %arg7[%c0_19, %c1_20, %c0_21, %c0_22], %36 {strides = array<i32>} : memref<1x3x128x128xf32, #tpu.memory_space<vmem>>, vector<1x1x128x128xf32>,
    %c2 = arith.constant 2 : index
    %c0_23 = arith.constant 0 : index
    %c0_24 = arith.constant 0 : index
    %37 = vector.load %arg8[%c2, %c0_23, %c0_24] : memref<3x128x16xbf16, #tpu.memory_space<vmem>>, vector<1x128x16xbf16>
    %38 = vector.shape_cast %37 : vector<1x128x16xbf16> to vector<128x16xbf16>
    %cst_25 = arith.constant dense<0.000000e+00> : vector<128x128xf32>
    %39 = tpu.matmul %38, %4, %cst_25 {dimension_numbers = #tpu.dot_dimension_numbers<[1], [1], [0], [0], [0, 0, 1, 0], [], []>} : vector<128x16xbf16>, vector<128x16xbf16>, vector<128x128xf32> -> vector<128x128xf32>
    %40 = arith.index_cast %arg0 : i32 to index
    %c2_26 = arith.constant 2 : index
    %41 = memref.load %arg3[%40, %c2_26] : memref<2x3xf32, #tpu.memory_space<smem>>
    %42 = vector.broadcast %41 : f32 to vector<128x128xf32>
    %43 = arith.addf %39, %42 : vector<128x128xf32>
    %cst_27 = arith.constant 0.000000e+00 : f32
    %44 = vector.broadcast %cst_27 : f32 to vector<128x128xf32>
    %45 = arith.subf %44, %43 : vector<128x128xf32>
    %46 = math.exp %45 : vector<128x128xf32>
    %cst_28 = arith.constant 1.000000e+00 : f32
    %47 = vector.broadcast %cst_28 : f32 to vector<128x128xf32>
    %48 = arith.addf %47, %46 : vector<128x128xf32>
    %49 = tpu.reciprocal %48 {approx = true} : vector<128x128xf32> -> vector<128x128xf32>
    %c0_29 = arith.constant 0 : index
    %c2_30 = arith.constant 2 : index
    %c0_31 = arith.constant 0 : index
    %c0_32 = arith.constant 0 : index
    %50 = vector.load %arg7[%c0_29, %c2_30, %c0_31, %c0_32] : memref<1x3x128x128xf32, #tpu.memory_space<vmem>>, vector<1x1x128x128xf32>
    %51 = vector.shape_cast %50 : vector<1x1x128x128xf32> to vector<128x128xf32>
    %52 = vector.shape_cast %49 : vector<128x128xf32> to vector<1x1x128x128xf32>
    tpu.vector_store %arg7[%c0_29, %c2_30, %c0_31, %c0_32], %52 {strides = array<i32>} : memref<1x3x128x128xf32, #tpu.memory_space<vmem>>, vector<1x1x128x128xf32>,
    return
  }
  func.func @transform_0(%arg0: i32, %arg1: i32, %arg2: i32) -> (i32, i32) {
    %c0_i32 = arith.constant 0 : i32
    %c0_i32_0 = arith.constant 0 : i32
    %c0_i32_1 = arith.constant 0 : i32
    return %c0_i32, %c0_i32_0 : i32, i32
  }
  func.func @transform_1(%arg0: i32, %arg1: i32, %arg2: i32) -> (i32, i32, i32) {
    %c0_i32 = arith.constant 0 : i32
    %c0_i32_0 = arith.constant 0 : i32
    return %arg0, %arg1, %c0_i32 : i32, i32, i32
  }
  func.func @transform_2(%arg0: i32, %arg1: i32, %arg2: i32) -> (i32, i32, i32) {
    %c0_i32 = arith.constant 0 : i32
    %c0_i32_0 = arith.constant 0 : i32
    return %arg0, %arg2, %c0_i32 : i32, i32, i32
  }
  func.func @transform_3(%arg0: i32, %arg1: i32, %arg2: i32) -> (i32, i32) {
    %c0_i32 = arith.constant 0 : i32
    %c0_i32_0 = arith.constant 0 : i32
    %c0_i32_1 = arith.constant 0 : i32
    return %c0_i32, %c0_i32_0 : i32, i32
  }
  func.func @transform_4(%arg0: i32, %arg1: i32, %arg2: i32) -> (i32, i32, i32, i32) {
    %c0_i32 = arith.constant 0 : i32
    %c0_i32_0 = arith.constant 0 : i32
    return %arg0, %c0_i32, %arg1, %arg2 : i32, i32, i32, i32
  }
}

</mosaic_0001>

<llo_original>
// kernel: tpu_custom_call.1
$region0: #{tpu_custom_call.1}
  #allocation0 [shape = 'u32[]', space=smem, size = 0x4, offset = 0x4, fixed_abs, tag = 'smem constant byte address 0x4 - core index']
  #allocation1 [shape = 'u32[144,128]{1,0:T(1,128)}', space=vmem, size = 0x12000, scoped, tag = 'internal scratch']
  #allocation2 [shape = 'bf16[3,128,16]{2,1,0:T(16,128)(2,1)}', space=vmem, size = 0x18000, scoped, tag = 'scratch operand']
  %s0 = inlined_call_operand.vmem [shape: f32[2,3], index: 0, kind: input, shape index: {}]
  %s1 = inlined_call_operand.vmem [shape: bf16[2,128,16], index: 1, kind: input, shape index: {}]
  %s2 = inlined_call_operand.vmem [shape: bf16[2,128,16], index: 2, kind: input, shape index: {}]
  %s3 = inlined_call_operand.vmem [shape: f32[3,16], index: 3, kind: input, shape index: {}]
  %s4 = inlined_call_operand.hbm [shape: f32[2,3,128,128], index: 4, kind: output, shape index: {}]
  %s5 = sld [smem:[#allocation0]]
  $region57: #{tpu_custom_call.1} parent=0
    _
  %s7 = ssub.s32 1, %s5
  %s8 = scalar_select 0, %s7, %s5
  $region1: #{tpu_custom_call.1} parent=0
    #allocation3 [shape = 'u8[1024]{0}', space=smem, size = 0x400, scoped, tag = 'input window, operand 0, single buffered']
    #allocation4 [shape = 's32[2]{0}', space=sflag, size = 0x8, scoped, tag = 'scoped memory for tpu_custom_call.1']
    #allocation5 [shape = 's32[2]{0}', space=sflag, size = 0x8, scoped, tag = 'scoped memory for tpu_custom_call.1']
    #allocation6 [shape = 'u8[393216]{0}', space=vmem, size = 0x60000, scoped, tag = 'output window, operand 0']
    %9 = vsyncpa [#allocation5], 0
    %10 = vsyncpa [#allocation4], 0
    %s11 = scalar_lea.sflag [#allocation4], 1
    %12 = vsyncpa %s11, 0
    loop: start=0, step=1, limit=4
    $region2: #{tpu_custom_call.1} parent=1 // loop_pre_header
      _
    $region3: #{tpu_custom_call.1} parent=1 // loop_header
      %s14 = sphi 0, %s18
      %p15 = scmp.ge.s32.totalorder %s14, 4
      %s21 = sphi 0, %s40
      %s22 = sphi 0, %s36
      %s23 = sphi 0, %s32
      %s24 = sphi 0, %s21
      %s25 = sphi 0, %s22
      %s26 = sphi 0, %s23
      %s27 = sphi 0, %s24
      %s28 = sphi 0, %s25
      %s29 = sphi 0, %s26
      %s41 = sphi 0, %s41
      %s43 = sphi 0, %s41
      %s44 = sphi 0, %s43
      %s58 = sphi 0, %s44
      %s66 = sphi 0, %s68
      %s69 = sphi 0, %s66
      %s70 = sphi 0, %s69
      %s86 = sphi 0, %s70
      %s94 = sphi 0, %s96
      %s97 = sphi 0, %s94
      %s98 = sphi 0, %s97
      %s114 = sphi 0, %s98
      %s118 = sphi 0, %s118
      %s120 = sphi 0, %s118
      %s121 = sphi 0, %s120
      %s135 = sphi 0, %s121
      %s145 = sphi 0, %s147
      %s148 = sphi 0, %s145
      %s149 = sphi 0, %s148
      %s165 = sphi 0, %s149
    $region4: #{tpu_custom_call.1} parent=1 // loop_header_branch
      %17 = sbr.rel (%p15) target = $region8
    $region5: #{tpu_custom_call.1} parent=1 // loop_body
      %s19 = ssub.s32 %s14, 1
      %s20 = ssub.s32 %s14, 2
      %s30 = sadd.s32 1, %s23
      %p31 = scmp.ge.s32.totalorder %s30, 1
      %s32 = scalar_select %p31, 0, %s30
      %s33 = sadd.s32 1, %s22
      %s34 = scalar_select %p31, %s33, %s22
      %p35 = scmp.ge.s32.totalorder %s34, 1
      %s36 = scalar_select %p35, 0, %s34
      %s37 = sadd.s32 1, %s21
      %s38 = scalar_select %p35, %s37, %s21
      %p39 = scmp.ge.s32.totalorder %s38, 2
      %s40 = scalar_select %p39, 0, %s38
      %s42 = sadd.s32 %s41, 1
      %p45 = scmp.eq.s32.totalorder %s14, 1
      %p46 = scmp.ne.s32.totalorder %s41, %s43
      %p47 = scmp.eq.s32.totalorder %s14, 0
      %p48 = por %p46, %p47
      %p49 = scmp.ne.s32.totalorder %s41, %s43
      %p50 = scmp.eq.s32.totalorder %s19, 1
      %p51 = por %p49, %p50
      %p52 = scmp.ne.s32.totalorder %s43, %s44
      %p53 = scmp.eq.s32.totalorder %s19, 0
      %p54 = por %p52, %p53
      %p55 = scmp.ne.s32.totalorder %s43, %s44
      %p56 = scmp.eq.s32.totalorder %s20, 1
      %p57 = por %p55, %p56
      %p59 = scmp.ne.s32.totalorder %s44, %s58
      %p60 = scmp.eq.s32.totalorder %s20, 0
      %p61 = por %p59, %p60
      %s62 = ssub.s32 %s21, %s40
      %s63 = ssub.s32 %s22, %s36
      %s64 = sor.u32 %s62, %s63
      %p65 = scmp.eq.s32.totalorder %s64, 0
      %s67 = sadd.s32 %s66, 1
      %s68 = scalar_select %p65, %s66, %s67
      %p71 = pneg %p65
      %p72 = scmp.eq.s32.totalorder %s14, 1
      %p73 = por %p71, %p72
      %p74 = scmp.ne.s32.totalorder %s66, %s69
      %p75 = scmp.eq.s32.totalorder %s14, 0
      %p76 = por %p74, %p75
      %p77 = scmp.ne.s32.totalorder %s66, %s69
      %p78 = scmp.eq.s32.totalorder %s19, 1
      %p79 = por %p77, %p78
      %p80 = scmp.ne.s32.totalorder %s69, %s70
      %p81 = scmp.eq.s32.totalorder %s19, 0
      %p82 = por %p80, %p81
      %p83 = scmp.ne.s32.totalorder %s69, %s70
      %p84 = scmp.eq.s32.totalorder %s20, 1
      %p85 = por %p83, %p84
      %p87 = scmp.ne.s32.totalorder %s70, %s86
      %p88 = scmp.eq.s32.totalorder %s20, 0
      %p89 = por %p87, %p88
      %s90 = ssub.s32 %s21, %s40
      %s91 = ssub.s32 %s23, %s32
      %s92 = sor.u32 %s90, %s91
      %p93 = scmp.eq.s32.totalorder %s92, 0
      %s95 = sadd.s32 %s94, 1
      %s96 = scalar_select %p93, %s94, %s95
      %p99 = pneg %p93
      %p100 = scmp.eq.s32.totalorder %s14, 1
      %p101 = por %p99, %p100
      %p102 = scmp.ne.s32.totalorder %s94, %s97
      %p103 = scmp.eq.s32.totalorder %s14, 0
      %p104 = por %p102, %p103
      %p105 = scmp.ne.s32.totalorder %s94, %s97
      %p106 = scmp.eq.s32.totalorder %s19, 1
      %p107 = por %p105, %p106
      %p108 = scmp.ne.s32.totalorder %s97, %s98
      %p109 = scmp.eq.s32.totalorder %s19, 0
      %p110 = por %p108, %p109
      %p111 = scmp.ne.s32.totalorder %s97, %s98
      %p112 = scmp.eq.s32.totalorder %s20, 1
      %p113 = por %p111, %p112
      %p115 = scmp.ne.s32.totalorder %s98, %s114
      %p116 = scmp.eq.s32.totalorder %s20, 0
      %p117 = por %p115, %p116
      %s119 = sadd.s32 %s118, 1
      %p122 = scmp.eq.s32.totalorder %s14, 1
      %p123 = scmp.ne.s32.totalorder %s118, %s120
      %p124 = scmp.eq.s32.totalorder %s14, 0
      %p125 = por %p123, %p124
      %p126 = scmp.ne.s32.totalorder %s118, %s120
      %p127 = scmp.eq.s32.totalorder %s19, 1
      %p128 = por %p126, %p127
      %p129 = scmp.ne.s32.totalorder %s120, %s121
      %p130 = scmp.eq.s32.totalorder %s19, 0
      %p131 = por %p129, %p130
      %p132 = scmp.ne.s32.totalorder %s120, %s121
      %p133 = scmp.eq.s32.totalorder %s20, 1
      %p134 = por %p132, %p133
      %p136 = scmp.ne.s32.totalorder %s121, %s135
      %p137 = scmp.eq.s32.totalorder %s20, 0
      %p138 = por %p136, %p137
      %s139 = ssub.s32 %s21, %s40
      %s140 = ssub.s32 %s22, %s36
      %s141 = sor.u32 %s139, %s140
      %s142 = ssub.s32 %s23, %s32
      %s143 = sor.u32 %s141, %s142
      %p144 = scmp.eq.s32.totalorder %s143, 0
      %s146 = sadd.s32 %s145, 1
      %s147 = scalar_select %p144, %s145, %s146
      %p150 = pneg %p144
      %p151 = scmp.eq.s32.totalorder %s14, 1
      %p152 = por %p150, %p151
      %p153 = scmp.ne.s32.totalorder %s145, %s148
      %p154 = scmp.eq.s32.totalorder %s14, 0
      %p155 = por %p153, %p154
      %p156 = scmp.ne.s32.totalorder %s145, %s148
      %p157 = scmp.eq.s32.totalorder %s19, 1
      %p158 = por %p156, %p157
      %p159 = scmp.ne.s32.totalorder %s148, %s149
      %p160 = scmp.eq.s32.totalorder %s19, 0
      %p161 = por %p159, %p160
      %p162 = scmp.ne.s32.totalorder %s148, %s149
      %p163 = scmp.eq.s32.totalorder %s20, 1
      %p164 = por %p162, %p163
      %p166 = scmp.ne.s32.totalorder %s149, %s165
      %p167 = scmp.eq.s32.totalorder %s20, 0
      %p168 = por %p166, %p167
      %p169 = scmp.le.s32.totalorder 1, %s14
      %p170 = scmp.lt.s32.totalorder %s14, 3
      %p171 = pnand %p169, %p170
      %p172 = pneg %p171
      // Predicated region
      $region9: #{tpu_custom_call.1} parent=5 // pred_check
        _
      $region10: #{tpu_custom_call.1} parent=5 // pred_check_branch
        %174 = sbr.rel (%p171) target = $region12
      $region11: #{tpu_custom_call.1} parent=5 // pred_region
        %s175 = ssub.s32 %s14, 1
        // Predicated region
        $region13: #{tpu_custom_call.1} parent=11 // pred_check
          %p176 = pneg %p54
        $region14: #{tpu_custom_call.1} parent=11 // pred_check_branch
          %178 = sbr.rel (%p176) target = $region16
        $region15: #{tpu_custom_call.1} parent=11 // pred_region
          %s180 = ssub.s32 32, 32
          %181 = vsyncadd [#allocation5], %s180
          %s183 = sshll.u32 %s0, 4
          %s184 = int_to_ptr.vmem [resolvable:$true] %s183
          %186 = dma.vmem_to_smem %s184, 32, [#allocation3], [#allocation5]
        $region16: #{tpu_custom_call.1} parent=11 // pred_fallthru
          _
        // Predicated region
        $region17: #{tpu_custom_call.1} parent=11 // pred_check
          %p187 = pneg %p131
        $region18: #{tpu_custom_call.1} parent=11 // pred_check_branch
          %189 = sbr.rel (%p187) target = $region20
        $region19: #{tpu_custom_call.1} parent=11 // pred_region
          _
        $region20: #{tpu_custom_call.1} parent=11 // pred_fallthru
          _
      $region12: #{tpu_custom_call.1} parent=5 // pred_fallthru
        _
      %p190 = scmp.lt.s32.totalorder %s14, 2
      // Predicated region
      $region21: #{tpu_custom_call.1} parent=5 // pred_check
        %p191 = pneg %p190
      $region22: #{tpu_custom_call.1} parent=5 // pred_check_branch
        %193 = sbr.rel (%p191) target = $region24
      $region23: #{tpu_custom_call.1} parent=5 // pred_region
        // Predicated region
        $region25: #{tpu_custom_call.1} parent=23 // pred_check
          %p194 = pneg %p76
        $region26: #{tpu_custom_call.1} parent=23 // pred_check_branch
          %196 = sbr.rel (%p194) target = $region28
        $region27: #{tpu_custom_call.1} parent=23 // pred_region
          %s197 = smul.u32 16, %s22
          %p198 = scmp.lt.s32.totalorder %s21, 1
          %s199 = scalar_select %p198, %s21, 1
          %p200 = scmp.lt.s32.totalorder %s197, 15
          %s201 = scalar_select %p200, %s197, 15
          %s202 = smul.addr %s199, 16
          %s203 = sadd.s32 %s201, %s202
          %s204 = smul.addr %s203, 4
          %s205 = scalar_lea.vmem %s1, %s204
          %s206 = smul.u32 16, %s22
        $region28: #{tpu_custom_call.1} parent=23 // pred_fallthru
          _
        // Predicated region
        $region29: #{tpu_custom_call.1} parent=23 // pred_check
          %p207 = pneg %p104
        $region30: #{tpu_custom_call.1} parent=23 // pred_check_branch
          %209 = sbr.rel (%p207) target = $region32
        $region31: #{tpu_custom_call.1} parent=23 // pred_region
          %s210 = smul.u32 16, %s23
          %p211 = scmp.lt.s32.totalorder %s21, 1
          %s212 = scalar_select %p211, %s21, 1
          %p213 = scmp.lt.s32.totalorder %s210, 15
          %s214 = scalar_select %p213, %s210, 15
          %s215 = smul.addr %s212, 16
          %s216 = sadd.s32 %s214, %s215
          %s217 = smul.addr %s216, 4
          %s218 = scalar_lea.vmem %s2, %s217
          %s219 = smul.u32 16, %s23
        $region32: #{tpu_custom_call.1} parent=23 // pred_fallthru
          _
      $region24: #{tpu_custom_call.1} parent=5 // pred_fallthru
        _
      %p220 = scmp.le.s32.totalorder 1, %s14
      %p221 = scmp.lt.s32.totalorder %s14, 3
      %p222 = pnand %p220, %p221
      %p223 = pneg %p222
      // Predicated region
      $region33: #{tpu_custom_call.1} parent=5 // pred_check
        _
      $region34: #{tpu_custom_call.1} parent=5 // pred_check_branch
        %225 = sbr.rel (%p222) target = $region36
      $region35: #{tpu_custom_call.1} parent=5 // pred_region
        %s226 = ssub.s32 %s14, 1
        // Predicated region
        $region37: #{tpu_custom_call.1} parent=35 // pred_check
          %p227 = pneg %p54
        $region38: #{tpu_custom_call.1} parent=35 // pred_check_branch
          %229 = sbr.rel (%p227) target = $region40
        $region39: #{tpu_custom_call.1} parent=35 // pred_region
          %230 = dma.done [#allocation5], 32
        $region40: #{tpu_custom_call.1} parent=35 // pred_fallthru
          _
        %231 = sfence
        %p232 = pneg %p54
        %p233 = pneg %p51
        %s234 = smul.u32 16, %s25
        %p235 = scmp.lt.s32.totalorder %s24, 1
        %s236 = scalar_select %p235, %s24, 1
        %p237 = scmp.lt.s32.totalorder %s234, 15
        %s238 = scalar_select %p237, %s234, 15
        %s239 = smul.addr %s236, 16
        %s240 = sadd.s32 %s238, %s239
        %s241 = smul.addr %s240, 4
        %s242 = scalar_lea.vmem %s1, %s241
        %p243 = pneg %p82
        %p244 = pneg %p79
        %s245 = smul.u32 16, %s26
        %p246 = scmp.lt.s32.totalorder %s24, 1
        %s247 = scalar_select %p246, %s24, 1
        %p248 = scmp.lt.s32.totalorder %s245, 15
        %s249 = scalar_select %p248, %s245, 15
        %s250 = smul.addr %s247, 16
        %s251 = sadd.s32 %s249, %s250
        %s252 = smul.addr %s251, 4
        %s253 = scalar_lea.vmem %s2, %s252
        %p254 = pneg %p110
        %p255 = pneg %p107
        %p256 = pneg %p131
        %p257 = pneg %p128
        %p258 = pneg %p161
        %p259 = pneg %p158
        %s260 = sand.u32 %s148, 1
        %s261 = scalar_lea.sflag [#allocation4], %s260
        %s262 = sand.u32 %s148, 1
        %s263 = smul.addr %s262, 384
        %s264 = scalar_lea.vmem [#allocation6], %s263
        %s265 = smul.u32 16, %s25
        %p266 = scmp.lt.s32.totalorder %s24, 1
        %s267 = scalar_select %p266, %s24, 1
        %p268 = scmp.lt.s32.totalorder %s265, 15
        %s269 = scalar_select %p268, %s265, 15
        %s270 = smul.addr %s267, 16
        %s271 = sadd.s32 %s269, %s270
        %s272 = smul.addr %s271, 4
        %s273 = scalar_lea.vmem %s1, %s272
        %s274 = smul.u32 16, %s25
        %s275 = smul.u32 16, %s26
        %p276 = scmp.lt.s32.totalorder %s24, 1
        %s277 = scalar_select %p276, %s24, 1
        %p278 = scmp.lt.s32.totalorder %s275, 15
        %s279 = scalar_select %p278, %s275, 15
        %s280 = smul.addr %s277, 16
        %s281 = sadd.s32 %s279, %s280
        %s282 = smul.addr %s281, 4
        %s283 = scalar_lea.vmem %s2, %s282
        %s284 = smul.u32 16, %s26
        %s285 = smul.u32 16, %s25
        %p287 = scmp.eq.s32.totalorder %s26, 0
        // Predicated region
        $region41: #{tpu_custom_call.1} parent=35 // pred_check
          %p288 = pneg %p287
        $region42: #{tpu_custom_call.1} parent=35 // pred_check_branch
          %290 = sbr.rel (%p288) target = $region44
        $region43: #{tpu_custom_call.1} parent=35 // pred_region
          %v291 = vld [vmem:[%s273] sm:$0xf]
          %v292 = vld [vmem:[%s273 + $0x4] sm:$0xf]
          %v293 = vld [vmem:[%s273 + $0x8] sm:$0xf]
          %v294 = vld [vmem:[%s273 + $0xc] sm:$0xf]
          %v295 = vld [vmem:[%s273 + $0x10] sm:$0xf]
          %v296 = vld [vmem:[%s273 + $0x14] sm:$0xf]
          %v297 = vld [vmem:[%s273 + $0x18] sm:$0xf]
          %v298 = vld [vmem:[%s273 + $0x1c] sm:$0xf]
          %v299 = vld [vmem:[%s273 + $0x20] sm:$0xf]
          %v300 = vld [vmem:[%s273 + $0x24] sm:$0xf]
          %v301 = vld [vmem:[%s273 + $0x28] sm:$0xf]
          %v302 = vld [vmem:[%s273 + $0x2c] sm:$0xf]
          %v303 = vld [vmem:[%s273 + $0x30] sm:$0xf]
          %v304 = vld [vmem:[%s273 + $0x34] sm:$0xf]
          %v305 = vld [vmem:[%s273 + $0x38] sm:$0xf]
          %v306 = vld [vmem:[%s273 + $0x3c] sm:$0xf]
          %v307 = vunpack.c.l.bf16 %v291
          %v308 = vunpack.c.l.bf16 %v292
          %v309 = vunpack.c.l.bf16 %v293
          %v310 = vunpack.c.l.bf16 %v294
          %v311 = vunpack.c.l.bf16 %v295
          %v312 = vunpack.c.l.bf16 %v296
          %v313 = vunpack.c.l.bf16 %v297
          %v314 = vunpack.c.l.bf16 %v298
          %v315 = vunpack.c.l.bf16 %v299
          %v316 = vunpack.c.l.bf16 %v300
          %v317 = vunpack.c.l.bf16 %v301
          %v318 = vunpack.c.l.bf16 %v302
          %v319 = vunpack.c.l.bf16 %v303
          %v320 = vunpack.c.l.bf16 %v304
          %v321 = vunpack.c.l.bf16 %v305
          %v322 = vunpack.c.l.bf16 %v306
          %v323 = vld [vmem:[%s3] sm:$0x1]
          %v324 = vlaneseq
          %v325 = vshrl.u32 %v324, 7
          %v326 = vsub.s32 0, %v325
          %v327 = vrot.slane %v323, %v326
          %v328 = vmul.f32 %v307, %v327
          %v329 = vmul.f32 %v308, %v327
          %v330 = vmul.f32 %v309, %v327
          %v331 = vmul.f32 %v310, %v327
          %v332 = vmul.f32 %v311, %v327
          %v333 = vmul.f32 %v312, %v327
          %v334 = vmul.f32 %v313, %v327
          %v335 = vmul.f32 %v314, %v327
          %v336 = vmul.f32 %v315, %v327
          %v337 = vmul.f32 %v316, %v327
          %v338 = vmul.f32 %v317, %v327
          %v339 = vmul.f32 %v318, %v327
          %v340 = vmul.f32 %v319, %v327
          %v341 = vmul.f32 %v320, %v327
          %v342 = vmul.f32 %v321, %v327
          %v343 = vmul.f32 %v322, %v327
          %v344 = vpack.c.bf16 %v329, %v328
          %v345 = vpack.c.bf16 %v331, %v330
          %v346 = vpack.c.bf16 %v333, %v332
          %v347 = vpack.c.bf16 %v335, %v334
          %v348 = vpack.c.bf16 %v337, %v336
          %v349 = vpack.c.bf16 %v339, %v338
          %v350 = vpack.c.bf16 %v341, %v340
          %v351 = vpack.c.bf16 %v343, %v342
          %vm352 = vcmask 130048
          %353 = vst.msk [vmem:[#allocation2] sm:$0xff] %vm352, %v344
          %354 = vst.msk [vmem:[#allocation2 + $0x8] sm:$0xff] %vm352, %v345
          %355 = vst.msk [vmem:[#allocation2 + $0x10] sm:$0xff] %vm352, %v346
          %356 = vst.msk [vmem:[#allocation2 + $0x18] sm:$0xff] %vm352, %v347
          %357 = vst.msk [vmem:[#allocation2 + $0x20] sm:$0xff] %vm352, %v348
          %358 = vst.msk [vmem:[#allocation2 + $0x28] sm:$0xff] %vm352, %v349
          %359 = vst.msk [vmem:[#allocation2 + $0x30] sm:$0xff] %vm352, %v350
          %360 = vst.msk [vmem:[#allocation2 + $0x38] sm:$0xff] %vm352, %v351
          %v361 = vld [vmem:[%s3 + $0x1] sm:$0x1]
          %v362 = vlaneseq
          %v363 = vshrl.u32 %v362, 7
          %v364 = vsub.s32 0, %v363
          %v365 = vrot.slane %v361, %v364
          %v366 = vmul.f32 %v307, %v365
          %v367 = vmul.f32 %v308, %v365
          %v368 = vmul.f32 %v309, %v365
          %v369 = vmul.f32 %v310, %v365
          %v370 = vmul.f32 %v311, %v365
          %v371 = vmul.f32 %v312, %v365
          %v372 = vmul.f32 %v313, %v365
          %v373 = vmul.f32 %v314, %v365
          %v374 = vmul.f32 %v315, %v365
          %v375 = vmul.f32 %v316, %v365
          %v376 = vmul.f32 %v317, %v365
          %v377 = vmul.f32 %v318, %v365
          %v378 = vmul.f32 %v319, %v365
          %v379 = vmul.f32 %v320, %v365
          %v380 = vmul.f32 %v321, %v365
          %v381 = vmul.f32 %v322, %v365
          %v382 = vpack.c.bf16 %v367, %v366
          %v383 = vpack.c.bf16 %v369, %v368
          %v384 = vpack.c.bf16 %v371, %v370
          %v385 = vpack.c.bf16 %v373, %v372
          %v386 = vpack.c.bf16 %v375, %v374
          %v387 = vpack.c.bf16 %v377, %v376
          %v388 = vpack.c.bf16 %v379, %v378
          %v389 = vpack.c.bf16 %v381, %v380
          %s390 = scalar_lea.vmem [#allocation2], 64
          %391 = vst.msk [vmem:[%s390] sm:$0xff] %vm352, %v382
          %392 = vst.msk [vmem:[%s390 + $0x8] sm:$0xff] %vm352, %v383
          %393 = vst.msk [vmem:[%s390 + $0x10] sm:$0xff] %vm352, %v384
          %394 = vst.msk [vmem:[%s390 + $0x18] sm:$0xff] %vm352, %v385
          %395 = vst.msk [vmem:[%s390 + $0x20] sm:$0xff] %vm352, %v386
          %396 = vst.msk [vmem:[%s390 + $0x28] sm:$0xff] %vm352, %v387
          %397 = vst.msk [vmem:[%s390 + $0x30] sm:$0xff] %vm352, %v388
          %398 = vst.msk [vmem:[%s390 + $0x38] sm:$0xff] %vm352, %v389
          %v399 = vld [vmem:[%s3 + $0x2] sm:$0x1]
          %v400 = vlaneseq
          %v401 = vshrl.u32 %v400, 7
          %v402 = vsub.s32 0, %v401
          %v403 = vrot.slane %v399, %v402
          %v404 = vmul.f32 %v307, %v403
          %v405 = vmul.f32 %v308, %v403
          %v406 = vmul.f32 %v309, %v403
          %v407 = vmul.f32 %v310, %v403
          %v408 = vmul.f32 %v311, %v403
          %v409 = vmul.f32 %v312, %v403
          %v410 = vmul.f32 %v313, %v403
          %v411 = vmul.f32 %v314, %v403
          %v412 = vmul.f32 %v315, %v403
          %v413 = vmul.f32 %v316, %v403
          %v414 = vmul.f32 %v317, %v403
          %v415 = vmul.f32 %v318, %v403
          %v416 = vmul.f32 %v319, %v403
          %v417 = vmul.f32 %v320, %v403
          %v418 = vmul.f32 %v321, %v403
          %v419 = vmul.f32 %v322, %v403
          %v420 = vpack.c.bf16 %v405, %v404
          %v421 = vpack.c.bf16 %v407, %v406
          %v422 = vpack.c.bf16 %v409, %v408
          %v423 = vpack.c.bf16 %v411, %v410
          %v424 = vpack.c.bf16 %v413, %v412
          %v425 = vpack.c.bf16 %v415, %v414
          %v426 = vpack.c.bf16 %v417, %v416
          %v427 = vpack.c.bf16 %v419, %v418
          %s428 = scalar_lea.vmem [#allocation2], 128
          %429 = vst.msk [vmem:[%s428] sm:$0xff] %vm352, %v420
          %430 = vst.msk [vmem:[%s428 + $0x8] sm:$0xff] %vm352, %v421
          %431 = vst.msk [vmem:[%s428 + $0x10] sm:$0xff] %vm352, %v422
          %432 = vst.msk [vmem:[%s428 + $0x18] sm:$0xff] %vm352, %v423
          %433 = vst.msk [vmem:[%s428 + $0x20] sm:$0xff] %vm352, %v424
          %434 = vst.msk [vmem:[%s428 + $0x28] sm:$0xff] %vm352, %v425
          %435 = vst.msk [vmem:[%s428 + $0x30] sm:$0xff] %vm352, %v426
          %436 = vst.msk [vmem:[%s428 + $0x38] sm:$0xff] %vm352, %v427
        $region44: #{tpu_custom_call.1} parent=35 // pred_fallthru
          _
        %v437 = vld [vmem:[%s283] sm:$0xf]
        %v438 = vld [vmem:[%s283 + $0x4] sm:$0xf]
        %v439 = vld [vmem:[%s283 + $0x8] sm:$0xf]
        %v440 = vld [vmem:[%s283 + $0xc] sm:$0xf]
        %v441 = vld [vmem:[%s283 + $0x10] sm:$0xf]
        %v442 = vld [vmem:[%s283 + $0x14] sm:$0xf]
        %v443 = vld [vmem:[%s283 + $0x18] sm:$0xf]
        %v444 = vld [vmem:[%s283 + $0x1c] sm:$0xf]
        %v445 = vld [vmem:[%s283 + $0x20] sm:$0xf]
        %v446 = vld [vmem:[%s283 + $0x24] sm:$0xf]
        %v447 = vld [vmem:[%s283 + $0x28] sm:$0xf]
        %v448 = vld [vmem:[%s283 + $0x2c] sm:$0xf]
        %v449 = vld [vmem:[%s283 + $0x30] sm:$0xf]
        %v450 = vld [vmem:[%s283 + $0x34] sm:$0xf]
        %v451 = vld [vmem:[%s283 + $0x38] sm:$0xf]
        %v452 = vld [vmem:[%s283 + $0x3c] sm:$0xf]
        %v453 = vld [vmem:[#allocation2] sm:$0xff]
        %v454 = vld [vmem:[#allocation2 + $0x8] sm:$0xff]
        %v455 = vld [vmem:[#allocation2 + $0x10] sm:$0xff]
        %v456 = vld [vmem:[#allocation2 + $0x18] sm:$0xff]
        %v457 = vld [vmem:[#allocation2 + $0x20] sm:$0xff]
        %v458 = vld [vmem:[#allocation2 + $0x28] sm:$0xff]
        %v459 = vld [vmem:[#allocation2 + $0x30] sm:$0xff]
        %v460 = vld [vmem:[#allocation2 + $0x38] sm:$0xff]
        %s461 = smul.u32 %s24, 128
        %s462 = sld [smem:[#allocation3 + %s461]]
        %v463 = vstv %s462
        %v480 = vunpack.c.l.b16 %v437
        %v481 = vunpack.c.l.b16 %v438
        %v482 = vunpack.c.l.b16 %v439
        %v483 = vunpack.c.l.b16 %v440
        %v484 = vunpack.c.l.b16 %v441
        %v485 = vunpack.c.l.b16 %v442
        %v486 = vunpack.c.l.b16 %v443
        %v487 = vunpack.c.l.b16 %v444
        %v488 = vunpack.c.l.b16 %v445
        %v489 = vunpack.c.l.b16 %v446
        %v490 = vunpack.c.l.b16 %v447
        %v491 = vunpack.c.l.b16 %v448
        %v492 = vunpack.c.l.b16 %v449
        %v493 = vunpack.c.l.b16 %v450
        %v494 = vunpack.c.l.b16 %v451
        %v495 = vunpack.c.l.b16 %v452
        %v496 = vpack.c.b16 %v481, %v480
        %v497 = vpack.c.b16 %v483, %v482
        %v498 = vpack.c.b16 %v485, %v484
        %v499 = vpack.c.b16 %v487, %v486
        %v500 = vpack.c.b16 %v489, %v488
        %v501 = vpack.c.b16 %v491, %v490
        %v502 = vpack.c.b16 %v493, %v492
        %v503 = vpack.c.b16 %v495, %v494
        %vm504 = vcmask 130048
        %v506 = vsel %vm504, %v453, 0
        %v509 = vsel %vm504, %v454, 0
        %v512 = vsel %vm504, %v455, 0
        %v515 = vsel %vm504, %v456, 0
        %v518 = vsel %vm504, %v457, 0
        %v521 = vsel %vm504, %v458, 0
        %v524 = vsel %vm504, %v459, 0
        %v527 = vsel %vm504, %v460, 0
        %v530 = vsel %vm504, %v496, 0
        %v533 = vsel %vm504, %v497, 0
        %v536 = vsel %vm504, %v498, 0
        %v539 = vsel %vm504, %v499, 0
        %v542 = vsel %vm504, %v500, 0
        %v545 = vsel %vm504, %v501, 0
        %v548 = vsel %vm504, %v502, 0
        %v551 = vsel %vm504, %v503, 0
        %553 = vmatprep.subr.bf16.mxu0 0
        %554 = vmatpush1.bf16.xpose.msra.mxu0 %v530
        %555 = vmatprep.subr.bf16.mxu0 0
        %556 = vmatpush1.bf16.xpose.msra.mxu0 %v533
        %557 = vmatprep.subr.bf16.mxu0 0
        %558 = vmatpush1.bf16.xpose.msra.mxu0 %v536
        %559 = vmatprep.subr.bf16.mxu0 0
        %560 = vmatpush1.bf16.xpose.msra.mxu0 %v539
        %561 = vmatprep.subr.bf16.mxu0 0
        %562 = vmatpush1.bf16.xpose.msra.mxu0 %v542
        %563 = vmatprep.subr.bf16.mxu0 0
        %564 = vmatpush1.bf16.xpose.msra.mxu0 %v545
        %565 = vmatprep.subr.bf16.mxu0 0
        %566 = vmatpush1.bf16.xpose.msra.mxu0 %v548
        %567 = vmatprep.subr.bf16.mxu0 0
        %568 = vmatpush1.bf16.xpose.msra.mxu0 %v551
        %569 = vmatprep.subr.bf16.mxu0 0
        %570 = vmatpush1.bf16.xpose.msra.mxu0 0
        %571 = vmatprep.subr.bf16.mxu0 0
        %572 = vmatpush1.bf16.xpose.msra.mxu0 0
        %573 = vmatprep.subr.bf16.mxu0 0
        %574 = vmatpush1.bf16.xpose.msra.mxu0 0
        %575 = vmatprep.subr.bf16.mxu0 0
        %576 = vmatpush1.bf16.xpose.msra.mxu0 0
        %577 = vmatprep.subr.bf16.mxu0 0
        %578 = vmatpush1.bf16.xpose.msra.mxu0 0
        %579 = vmatprep.subr.bf16.mxu0 0
        %580 = vmatpush1.bf16.xpose.msra.mxu0 0
        %581 = vmatprep.subr.bf16.mxu0 0
        %582 = vmatpush1.bf16.xpose.msra.mxu0 0
        %583 = vmatprep.subr.bf16.mxu0 0
        %584 = vmatpush1.bf16.xpose.msra.mxu0 0
        %585 = vmatprep.mubr.bf16.mxu0 0
        %586 = vmatmul.mubr.bf16.gmra.mrb[0].mxu0 %v506
        %v587 = vpop.f32.mrb[0].mxu0
        %v588 = vadd.f32 %v463, %v587
        %v589 = vpop.f32.mrb[0].mxu0
        %v590 = vpop.f32.mrb[0].mxu0
        %v591 = vadd.f32 %v463, %v590
        %v592 = vpop.f32.mrb[0].mxu0
        %593 = vmatprep.mubr.bf16.mxu0 0
        %594 = vmatmul.mubr.bf16.gmra.mrb[0].mxu0 %v509
        %v595 = vpop.f32.mrb[0].mxu0
        %v596 = vadd.f32 %v463, %v595
        %v597 = vpop.f32.mrb[0].mxu0
        %v598 = vpop.f32.mrb[0].mxu0
        %v599 = vadd.f32 %v463, %v598
        %v600 = vpop.f32.mrb[0].mxu0
        %601 = vmatprep.mubr.bf16.mxu0 0
        %602 = vmatmul.mubr.bf16.gmra.mrb[0].mxu0 %v512
        %v603 = vpop.f32.mrb[0].mxu0
        %v604 = vadd.f32 %v463, %v603
        %v605 = vpop.f32.mrb[0].mxu0
        %v606 = vpop.f32.mrb[0].mxu0
        %v607 = vadd.f32 %v463, %v606
        %v608 = vpop.f32.mrb[0].mxu0
        %609 = vmatprep.mubr.bf16.mxu0 0
        %610 = vmatmul.mubr.bf16.gmra.mrb[0].mxu0 %v515
        %v611 = vpop.f32.mrb[0].mxu0
        %v612 = vadd.f32 %v463, %v611
        %v613 = vpop.f32.mrb[0].mxu0
        %v614 = vpop.f32.mrb[0].mxu0
        %v615 = vadd.f32 %v463, %v614
        %v616 = vpop.f32.mrb[0].mxu0
        %617 = vmatprep.mubr.bf16.mxu0 0
        %618 = vmatmul.mubr.bf16.gmra.mrb[0].mxu0 %v518
        %v619 = vpop.f32.mrb[0].mxu0
        %v620 = vadd.f32 %v463, %v619
        %v621 = vpop.f32.mrb[0].mxu0
        %v622 = vpop.f32.mrb[0].mxu0
        %v623 = vadd.f32 %v463, %v622
        %v624 = vpop.f32.mrb[0].mxu0
        %625 = vmatprep.mubr.bf16.mxu0 0
        %626 = vmatmul.mubr.bf16.gmra.mrb[0].mxu0 %v521
        %v627 = vpop.f32.mrb[0].mxu0
        %v628 = vadd.f32 %v463, %v627
        %v629 = vpop.f32.mrb[0].mxu0
        %v630 = vpop.f32.mrb[0].mxu0
        %v631 = vadd.f32 %v463, %v630
        %v632 = vpop.f32.mrb[0].mxu0
        %633 = vmatprep.mubr.bf16.mxu0 0
        %634 = vmatmul.mubr.bf16.gmra.mrb[0].mxu0 %v524
        %v635 = vpop.f32.mrb[0].mxu0
        %v636 = vadd.f32 %v463, %v635
        %v637 = vpop.f32.mrb[0].mxu0
        %v638 = vpop.f32.mrb[0].mxu0
        %v639 = vadd.f32 %v463, %v638
        %v640 = vpop.f32.mrb[0].mxu0
        %641 = vmatprep.mubr.bf16.mxu0 0
        %642 = vmatmul.mubr.bf16.gmra.mrb[0].mxu0 %v527
        %v643 = vpop.f32.mrb[0].mxu0
        %v644 = vadd.f32 %v463, %v643
        %v645 = vpop.f32.mrb[0].mxu0
        %v646 = vpop.f32.mrb[0].mxu0
        %v647 = vadd.f32 %v463, %v646
        %v648 = vpop.f32.mrb[0].mxu0
        %649 = vdwg.mxu0
        %v650 = vsub.f32 0.0, %v588
        %v651 = vsub.f32 0.0, %v591
        %v652 = vsub.f32 0.0, %v596
        %v653 = vsub.f32 0.0, %v599
        %v654 = vsub.f32 0.0, %v604
        %v655 = vsub.f32 0.0, %v607
        %v656 = vsub.f32 0.0, %v612
        %v657 = vsub.f32 0.0, %v615
        %v658 = vsub.f32 0.0, %v620
        %v659 = vsub.f32 0.0, %v623
        %v660 = vsub.f32 0.0, %v628
        %v661 = vsub.f32 0.0, %v631
        %v662 = vsub.f32 0.0, %v636
        %v663 = vsub.f32 0.0, %v639
        %v664 = vsub.f32 0.0, %v644
        %v665 = vsub.f32 0.0, %v647
        %v666 = vmul.f32 %v650, 1.442695
        %v667 = vpow.pop %v666
        %v668 = vmul.f32 %v651, 1.442695
        %v669 = vpow.pop %v668
        %v670 = vmul.f32 %v652, 1.442695
        %v671 = vpow.pop %v670
        %v672 = vmul.f32 %v653, 1.442695
        %v673 = vpow.pop %v672
        %v674 = vmul.f32 %v654, 1.442695
        %v675 = vpow.pop %v674
        %v676 = vmul.f32 %v655, 1.442695
        %v677 = vpow.pop %v676
        %v678 = vmul.f32 %v656, 1.442695
        %v679 = vpow.pop %v678
        %v680 = vmul.f32 %v657, 1.442695
        %v681 = vpow.pop %v680
        %v682 = vmul.f32 %v658, 1.442695
        %v683 = vpow.pop %v682
        %v684 = vmul.f32 %v659, 1.442695
        %v685 = vpow.pop %v684
        %v686 = vmul.f32 %v660, 1.442695
        %v687 = vpow.pop %v686
        %v688 = vmul.f32 %v661, 1.442695
        %v689 = vpow.pop %v688
        %v690 = vmul.f32 %v662, 1.442695
        %v691 = vpow.pop %v690
        %v692 = vmul.f32 %v663, 1.442695
        %v693 = vpow.pop %v692
        %v694 = vmul.f32 %v664, 1.442695
        %v695 = vpow.pop %v694
        %v696 = vmul.f32 %v665, 1.442695
        %v697 = vpow.pop %v696
        %v698 = vadd.f32 %v667, 1.0
        %v699 = vadd.f32 %v669, 1.0
        %v700 = vadd.f32 %v671, 1.0
        %v701 = vadd.f32 %v673, 1.0
        %v702 = vadd.f32 %v675, 1.0
        %v703 = vadd.f32 %v677, 1.0
        %v704 = vadd.f32 %v679, 1.0
        %v705 = vadd.f32 %v681, 1.0
        %v706 = vadd.f32 %v683, 1.0
        %v707 = vadd.f32 %v685, 1.0
        %v708 = vadd.f32 %v687, 1.0
        %v709 = vadd.f32 %v689, 1.0
        %v710 = vadd.f32 %v691, 1.0
        %v711 = vadd.f32 %v693, 1.0
        %v712 = vadd.f32 %v695, 1.0
        %v713 = vadd.f32 %v697, 1.0
        %v714 = vrcp.pop %v698
        %v715 = vrcp.pop %v699
        %v716 = vrcp.pop %v700
        %v717 = vrcp.pop %v701
        %v718 = vrcp.pop %v702
        %v719 = vrcp.pop %v703
        %v720 = vrcp.pop %v704
        %v721 = vrcp.pop %v705
        %v722 = vrcp.pop %v706
        %v723 = vrcp.pop %v707
        %v724 = vrcp.pop %v708
        %v725 = vrcp.pop %v709
        %v726 = vrcp.pop %v710
        %v727 = vrcp.pop %v711
        %v728 = vrcp.pop %v712
        %v729 = vrcp.pop %v713
        %730 = vst [vmem:[%s264] sm:$0xff] %v714
        %731 = vst [vmem:[%s264 + $0x8] sm:$0xff] %v715
        %732 = vst [vmem:[%s264 + $0x10] sm:$0xff] %v716
        %733 = vst [vmem:[%s264 + $0x18] sm:$0xff] %v717
        %734 = vst [vmem:[%s264 + $0x20] sm:$0xff] %v718
        %735 = vst [vmem:[%s264 + $0x28] sm:$0xff] %v719
        %736 = vst [vmem:[%s264 + $0x30] sm:$0xff] %v720
        %737 = vst [vmem:[%s264 + $0x38] sm:$0xff] %v721
        %738 = vst [vmem:[%s264 + $0x40] sm:$0xff] %v722
        %739 = vst [vmem:[%s264 + $0x48] sm:$0xff] %v723
        %740 = vst [vmem:[%s264 + $0x50] sm:$0xff] %v724
        %741 = vst [vmem:[%s264 + $0x58] sm:$0xff] %v725
        %742 = vst [vmem:[%s264 + $0x60] sm:$0xff] %v726
        %743 = vst [vmem:[%s264 + $0x68] sm:$0xff] %v727
        %744 = vst [vmem:[%s264 + $0x70] sm:$0xff] %v728
        %745 = vst [vmem:[%s264 + $0x78] sm:$0xff] %v729
        %s746 = scalar_lea.vmem [#allocation2], 64
        %v747 = vld [vmem:[%s746] sm:$0xff]
        %v748 = vld [vmem:[%s746 + $0x8] sm:$0xff]
        %v749 = vld [vmem:[%s746 + $0x10] sm:$0xff]
        %v750 = vld [vmem:[%s746 + $0x18] sm:$0xff]
        %v751 = vld [vmem:[%s746 + $0x20] sm:$0xff]
        %v752 = vld [vmem:[%s746 + $0x28] sm:$0xff]
        %v753 = vld [vmem:[%s746 + $0x30] sm:$0xff]
        %v754 = vld [vmem:[%s746 + $0x38] sm:$0xff]
        %s755 = sadd.s32 %s461, 1
        %s756 = sld [smem:[#allocation3 + %s755]]
        %v757 = vstv %s756
        %v759 = vsel %vm504, %v747, 0
        %v762 = vsel %vm504, %v748, 0
        %v765 = vsel %vm504, %v749, 0
        %v768 = vsel %vm504, %v750, 0
        %v771 = vsel %vm504, %v751, 0
        %v774 = vsel %vm504, %v752, 0
        %v777 = vsel %vm504, %v753, 0
        %v780 = vsel %vm504, %v754, 0
        %782 = vmatprep.subr.bf16.mxu0 0
        %783 = vmatpush1.bf16.xpose.msra.mxu0 %v530
        %784 = vmatprep.subr.bf16.mxu0 0
        %785 = vmatpush1.bf16.xpose.msra.mxu0 %v533
        %786 = vmatprep.subr.bf16.mxu0 0
        %787 = vmatpush1.bf16.xpose.msra.mxu0 %v536
        %788 = vmatprep.subr.bf16.mxu0 0
        %789 = vmatpush1.bf16.xpose.msra.mxu0 %v539
        %790 = vmatprep.subr.bf16.mxu0 0
        %791 = vmatpush1.bf16.xpose.msra.mxu0 %v542
        %792 = vmatprep.subr.bf16.mxu0 0
        %793 = vmatpush1.bf16.xpose.msra.mxu0 %v545
        %794 = vmatprep.subr.bf16.mxu0 0
        %795 = vmatpush1.bf16.xpose.msra.mxu0 %v548
        %796 = vmatprep.subr.bf16.mxu0 0
        %797 = vmatpush1.bf16.xpose.msra.mxu0 %v551
        %798 = vmatprep.subr.bf16.mxu0 0
        %799 = vmatpush1.bf16.xpose.msra.mxu0 0
        %800 = vmatprep.subr.bf16.mxu0 0
        %801 = vmatpush1.bf16.xpose.msra.mxu0 0
        %802 = vmatprep.subr.bf16.mxu0 0
        %803 = vmatpush1.bf16.xpose.msra.mxu0 0
        %804 = vmatprep.subr.bf16.mxu0 0
        %805 = vmatpush1.bf16.xpose.msra.mxu0 0
        %806 = vmatprep.subr.bf16.mxu0 0
        %807 = vmatpush1.bf16.xpose.msra.mxu0 0
        %808 = vmatprep.subr.bf16.mxu0 0
        %809 = vmatpush1.bf16.xpose.msra.mxu0 0
        %810 = vmatprep.subr.bf16.mxu0 0
        %811 = vmatpush1.bf16.xpose.msra.mxu0 0
        %812 = vmatprep.subr.bf16.mxu0 0
        %813 = vmatpush1.bf16.xpose.msra.mxu0 0
        %814 = vmatprep.mubr.bf16.mxu0 0
        %815 = vmatmul.mubr.bf16.gmra.mrb[0].mxu0 %v759
        %v816 = vpop.f32.mrb[0].mxu0
        %v817 = vadd.f32 %v757, %v816
        %v818 = vpop.f32.mrb[0].mxu0
        %v819 = vpop.f32.mrb[0].mxu0
        %v820 = vadd.f32 %v757, %v819
        %v821 = vpop.f32.mrb[0].mxu0
        %822 = vmatprep.mubr.bf16.mxu0 0
        %823 = vmatmul.mubr.bf16.gmra.mrb[0].mxu0 %v762
        %v824 = vpop.f32.mrb[0].mxu0
        %v825 = vadd.f32 %v757, %v824
        %v826 = vpop.f32.mrb[0].mxu0
        %v827 = vpop.f32.mrb[0].mxu0
        %v828 = vadd.f32 %v757, %v827
        %v829 = vpop.f32.mrb[0].mxu0
        %830 = vmatprep.mubr.bf16.mxu0 0
        %831 = vmatmul.mubr.bf16.gmra.mrb[0].mxu0 %v765
        %v832 = vpop.f32.mrb[0].mxu0
        %v833 = vadd.f32 %v757, %v832
        %v834 = vpop.f32.mrb[0].mxu0
        %v835 = vpop.f32.mrb[0].mxu0
        %v836 = vadd.f32 %v757, %v835
        %v837 = vpop.f32.mrb[0].mxu0
        %838 = vmatprep.mubr.bf16.mxu0 0
        %839 = vmatmul.mubr.bf16.gmra.mrb[0].mxu0 %v768
        %v840 = vpop.f32.mrb[0].mxu0
        %v841 = vadd.f32 %v757, %v840
        %v842 = vpop.f32.mrb[0].mxu0
        %v843 = vpop.f32.mrb[0].mxu0
        %v844 = vadd.f32 %v757, %v843
        %v845 = vpop.f32.mrb[0].mxu0
        %846 = vmatprep.mubr.bf16.mxu0 0
        %847 = vmatmul.mubr.bf16.gmra.mrb[0].mxu0 %v771
        %v848 = vpop.f32.mrb[0].mxu0
        %v849 = vadd.f32 %v757, %v848
        %v850 = vpop.f32.mrb[0].mxu0
        %v851 = vpop.f32.mrb[0].mxu0
        %v852 = vadd.f32 %v757, %v851
        %v853 = vpop.f32.mrb[0].mxu0
        %854 = vmatprep.mubr.bf16.mxu0 0
        %855 = vmatmul.mubr.bf16.gmra.mrb[0].mxu0 %v774
        %v856 = vpop.f32.mrb[0].mxu0
        %v857 = vadd.f32 %v757, %v856
        %v858 = vpop.f32.mrb[0].mxu0
        %v859 = vpop.f32.mrb[0].mxu0
        %v860 = vadd.f32 %v757, %v859
        %v861 = vpop.f32.mrb[0].mxu0
        %862 = vmatprep.mubr.bf16.mxu0 0
        %863 = vmatmul.mubr.bf16.gmra.mrb[0].mxu0 %v777
        %v864 = vpop.f32.mrb[0].mxu0
        %v865 = vadd.f32 %v757, %v864
        %v866 = vpop.f32.mrb[0].mxu0
        %v867 = vpop.f32.mrb[0].mxu0
        %v868 = vadd.f32 %v757, %v867
        %v869 = vpop.f32.mrb[0].mxu0
        %870 = vmatprep.mubr.bf16.mxu0 0
        %871 = vmatmul.mubr.bf16.gmra.mrb[0].mxu0 %v780
        %v872 = vpop.f32.mrb[0].mxu0
        %v873 = vadd.f32 %v757, %v872
        %v874 = vpop.f32.mrb[0].mxu0
        %v875 = vpop.f32.mrb[0].mxu0
        %v876 = vadd.f32 %v757, %v875
        %v877 = vpop.f32.mrb[0].mxu0
        %878 = vdwg.mxu0
        %v879 = vsub.f32 0.0, %v817
        %v880 = vsub.f32 0.0, %v820
        %v881 = vsub.f32 0.0, %v825
        %v882 = vsub.f32 0.0, %v828
        %v883 = vsub.f32 0.0, %v833
        %v884 = vsub.f32 0.0, %v836
        %v885 = vsub.f32 0.0, %v841
        %v886 = vsub.f32 0.0, %v844
        %v887 = vsub.f32 0.0, %v849
        %v888 = vsub.f32 0.0, %v852
        %v889 = vsub.f32 0.0, %v857
        %v890 = vsub.f32 0.0, %v860
        %v891 = vsub.f32 0.0, %v865
        %v892 = vsub.f32 0.0, %v868
        %v893 = vsub.f32 0.0, %v873
        %v894 = vsub.f32 0.0, %v876
        %v895 = vmul.f32 %v879, 1.442695
        %v896 = vpow.pop %v895
        %v897 = vmul.f32 %v880, 1.442695
        %v898 = vpow.pop %v897
        %v899 = vmul.f32 %v881, 1.442695
        %v900 = vpow.pop %v899
        %v901 = vmul.f32 %v882, 1.442695
        %v902 = vpow.pop %v901
        %v903 = vmul.f32 %v883, 1.442695
        %v904 = vpow.pop %v903
        %v905 = vmul.f32 %v884, 1.442695
        %v906 = vpow.pop %v905
        %v907 = vmul.f32 %v885, 1.442695
        %v908 = vpow.pop %v907
        %v909 = vmul.f32 %v886, 1.442695
        %v910 = vpow.pop %v909
        %v911 = vmul.f32 %v887, 1.442695
        %v912 = vpow.pop %v911
        %v913 = vmul.f32 %v888, 1.442695
        %v914 = vpow.pop %v913
        %v915 = vmul.f32 %v889, 1.442695
        %v916 = vpow.pop %v915
        %v917 = vmul.f32 %v890, 1.442695
        %v918 = vpow.pop %v917
        %v919 = vmul.f32 %v891, 1.442695
        %v920 = vpow.pop %v919
        %v921 = vmul.f32 %v892, 1.442695
        %v922 = vpow.pop %v921
        %v923 = vmul.f32 %v893, 1.442695
        %v924 = vpow.pop %v923
        %v925 = vmul.f32 %v894, 1.442695
        %v926 = vpow.pop %v925
        %v927 = vadd.f32 %v896, 1.0
        %v928 = vadd.f32 %v898, 1.0
        %v929 = vadd.f32 %v900, 1.0
        %v930 = vadd.f32 %v902, 1.0
        %v931 = vadd.f32 %v904, 1.0
        %v932 = vadd.f32 %v906, 1.0
        %v933 = vadd.f32 %v908, 1.0
        %v934 = vadd.f32 %v910, 1.0
        %v935 = vadd.f32 %v912, 1.0
        %v936 = vadd.f32 %v914, 1.0
        %v937 = vadd.f32 %v916, 1.0
        %v938 = vadd.f32 %v918, 1.0
        %v939 = vadd.f32 %v920, 1.0
        %v940 = vadd.f32 %v922, 1.0
        %v941 = vadd.f32 %v924, 1.0
        %v942 = vadd.f32 %v926, 1.0
        %v943 = vrcp.pop %v927
        %v944 = vrcp.pop %v928
        %v945 = vrcp.pop %v929
        %v946 = vrcp.pop %v930
        %v947 = vrcp.pop %v931
        %v948 = vrcp.pop %v932
        %v949 = vrcp.pop %v933
        %v950 = vrcp.pop %v934
        %v951 = vrcp.pop %v935
        %v952 = vrcp.pop %v936
        %v953 = vrcp.pop %v937
        %v954 = vrcp.pop %v938
        %v955 = vrcp.pop %v939
        %v956 = vrcp.pop %v940
        %v957 = vrcp.pop %v941
        %v958 = vrcp.pop %v942
        %s959 = scalar_lea.vmem %s264, 128 [#allocation6]
        %960 = vst [vmem:[%s959] sm:$0xff] %v943
        %961 = vst [vmem:[%s959 + $0x8] sm:$0xff] %v944
        %962 = vst [vmem:[%s959 + $0x10] sm:$0xff] %v945
        %963 = vst [vmem:[%s959 + $0x18] sm:$0xff] %v946
        %964 = vst [vmem:[%s959 + $0x20] sm:$0xff] %v947
        %965 = vst [vmem:[%s959 + $0x28] sm:$0xff] %v948
        %966 = vst [vmem:[%s959 + $0x30] sm:$0xff] %v949
        %967 = vst [vmem:[%s959 + $0x38] sm:$0xff] %v950
        %968 = vst [vmem:[%s959 + $0x40] sm:$0xff] %v951
        %969 = vst [vmem:[%s959 + $0x48] sm:$0xff] %v952
        %970 = vst [vmem:[%s959 + $0x50] sm:$0xff] %v953
        %971 = vst [vmem:[%s959 + $0x58] sm:$0xff] %v954
        %972 = vst [vmem:[%s959 + $0x60] sm:$0xff] %v955
        %973 = vst [vmem:[%s959 + $0x68] sm:$0xff] %v956
        %974 = vst [vmem:[%s959 + $0x70] sm:$0xff] %v957
        %975 = vst [vmem:[%s959 + $0x78] sm:$0xff] %v958
        %s976 = scalar_lea.vmem [#allocation2], 128
        %v977 = vld [vmem:[%s976] sm:$0xff]
        %v978 = vld [vmem:[%s976 + $0x8] sm:$0xff]
        %v979 = vld [vmem:[%s976 + $0x10] sm:$0xff]
        %v980 = vld [vmem:[%s976 + $0x18] sm:$0xff]
        %v981 = vld [vmem:[%s976 + $0x20] sm:$0xff]
        %v982 = vld [vmem:[%s976 + $0x28] sm:$0xff]
        %v983 = vld [vmem:[%s976 + $0x30] sm:$0xff]
        %v984 = vld [vmem:[%s976 + $0x38] sm:$0xff]
        %s985 = sadd.s32 %s461, 2
        %s986 = sld [smem:[#allocation3 + %s985]]
        %v987 = vstv %s986
        %v989 = vsel %vm504, %v977, 0
        %v992 = vsel %vm504, %v978, 0
        %v995 = vsel %vm504, %v979, 0
        %v998 = vsel %vm504, %v980, 0
        %v1001 = vsel %vm504, %v981, 0
        %v1004 = vsel %vm504, %v982, 0
        %v1007 = vsel %vm504, %v983, 0
        %v1010 = vsel %vm504, %v984, 0
        %1012 = vmatprep.subr.bf16.mxu0 0
        %1013 = vmatpush1.bf16.xpose.msra.mxu0 %v530
        %1014 = vmatprep.subr.bf16.mxu0 0
        %1015 = vmatpush1.bf16.xpose.msra.mxu0 %v533
        %1016 = vmatprep.subr.bf16.mxu0 0
        %1017 = vmatpush1.bf16.xpose.msra.mxu0 %v536
        %1018 = vmatprep.subr.bf16.mxu0 0
        %1019 = vmatpush1.bf16.xpose.msra.mxu0 %v539
        %1020 = vmatprep.subr.bf16.mxu0 0
        %1021 = vmatpush1.bf16.xpose.msra.mxu0 %v542
        %1022 = vmatprep.subr.bf16.mxu0 0
        %1023 = vmatpush1.bf16.xpose.msra.mxu0 %v545
        %1024 = vmatprep.subr.bf16.mxu0 0
        %1025 = vmatpush1.bf16.xpose.msra.mxu0 %v548
        %1026 = vmatprep.subr.bf16.mxu0 0
        %1027 = vmatpush1.bf16.xpose.msra.mxu0 %v551
        %1028 = vmatprep.subr.bf16.mxu0 0
        %1029 = vmatpush1.bf16.xpose.msra.mxu0 0
        %1030 = vmatprep.subr.bf16.mxu0 0
        %1031 = vmatpush1.bf16.xpose.msra.mxu0 0
        %1032 = vmatprep.subr.bf16.mxu0 0
        %1033 = vmatpush1.bf16.xpose.msra.mxu0 0
        %1034 = vmatprep.subr.bf16.mxu0 0
        %1035 = vmatpush1.bf16.xpose.msra.mxu0 0
        %1036 = vmatprep.subr.bf16.mxu0 0
        %1037 = vmatpush1.bf16.xpose.msra.mxu0 0
        %1038 = vmatprep.subr.bf16.mxu0 0
        %1039 = vmatpush1.bf16.xpose.msra.mxu0 0
        %1040 = vmatprep.subr.bf16.mxu0 0
        %1041 = vmatpush1.bf16.xpose.msra.mxu0 0
        %1042 = vmatprep.subr.bf16.mxu0 0
        %1043 = vmatpush1.bf16.xpose.msra.mxu0 0
        %1044 = vmatprep.mubr.bf16.mxu0 0
        %1045 = vmatmul.mubr.bf16.gmra.mrb[0].mxu0 %v989
        %v1046 = vpop.f32.mrb[0].mxu0
        %v1047 = vadd.f32 %v987, %v1046
        %v1048 = vpop.f32.mrb[0].mxu0
        %v1049 = vpop.f32.mrb[0].mxu0
        %v1050 = vadd.f32 %v987, %v1049
        %v1051 = vpop.f32.mrb[0].mxu0
        %1052 = vmatprep.mubr.bf16.mxu0 0
        %1053 = vmatmul.mubr.bf16.gmra.mrb[0].mxu0 %v992
        %v1054 = vpop.f32.mrb[0].mxu0
        %v1055 = vadd.f32 %v987, %v1054
        %v1056 = vpop.f32.mrb[0].mxu0
        %v1057 = vpop.f32.mrb[0].mxu0
        %v1058 = vadd.f32 %v987, %v1057
        %v1059 = vpop.f32.mrb[0].mxu0
        %1060 = vmatprep.mubr.bf16.mxu0 0
        %1061 = vmatmul.mubr.bf16.gmra.mrb[0].mxu0 %v995
        %v1062 = vpop.f32.mrb[0].mxu0
        %v1063 = vadd.f32 %v987, %v1062
        %v1064 = vpop.f32.mrb[0].mxu0
        %v1065 = vpop.f32.mrb[0].mxu0
        %v1066 = vadd.f32 %v987, %v1065
        %v1067 = vpop.f32.mrb[0].mxu0
        %1068 = vmatprep.mubr.bf16.mxu0 0
        %1069 = vmatmul.mubr.bf16.gmra.mrb[0].mxu0 %v998
        %v1070 = vpop.f32.mrb[0].mxu0
        %v1071 = vadd.f32 %v987, %v1070
        %v1072 = vpop.f32.mrb[0].mxu0
        %v1073 = vpop.f32.mrb[0].mxu0
        %v1074 = vadd.f32 %v987, %v1073
        %v1075 = vpop.f32.mrb[0].mxu0
        %1076 = vmatprep.mubr.bf16.mxu0 0
        %1077 = vmatmul.mubr.bf16.gmra.mrb[0].mxu0 %v1001
        %v1078 = vpop.f32.mrb[0].mxu0
        %v1079 = vadd.f32 %v987, %v1078
        %v1080 = vpop.f32.mrb[0].mxu0
        %v1081 = vpop.f32.mrb[0].mxu0
        %v1082 = vadd.f32 %v987, %v1081
        %v1083 = vpop.f32.mrb[0].mxu0
        %1084 = vmatprep.mubr.bf16.mxu0 0
        %1085 = vmatmul.mubr.bf16.gmra.mrb[0].mxu0 %v1004
        %v1086 = vpop.f32.mrb[0].mxu0
        %v1087 = vadd.f32 %v987, %v1086
        %v1088 = vpop.f32.mrb[0].mxu0
        %v1089 = vpop.f32.mrb[0].mxu0
        %v1090 = vadd.f32 %v987, %v1089
        %v1091 = vpop.f32.mrb[0].mxu0
        %1092 = vmatprep.mubr.bf16.mxu0 0
        %1093 = vmatmul.mubr.bf16.gmra.mrb[0].mxu0 %v1007
        %v1094 = vpop.f32.mrb[0].mxu0
        %v1095 = vadd.f32 %v987, %v1094
        %v1096 = vpop.f32.mrb[0].mxu0
        %v1097 = vpop.f32.mrb[0].mxu0
        %v1098 = vadd.f32 %v987, %v1097
        %v1099 = vpop.f32.mrb[0].mxu0
        %1100 = vmatprep.mubr.bf16.mxu0 0
        %1101 = vmatmul.mubr.bf16.gmra.mrb[0].mxu0 %v1010
        %v1102 = vpop.f32.mrb[0].mxu0
        %v1103 = vadd.f32 %v987, %v1102
        %v1104 = vpop.f32.mrb[0].mxu0
        %v1105 = vpop.f32.mrb[0].mxu0
        %v1106 = vadd.f32 %v987, %v1105
        %v1107 = vpop.f32.mrb[0].mxu0
        %1108 = vdwg.mxu0
        %v1109 = vsub.f32 0.0, %v1047
        %v1110 = vsub.f32 0.0, %v1050
        %v1111 = vsub.f32 0.0, %v1055
        %v1112 = vsub.f32 0.0, %v1058
        %v1113 = vsub.f32 0.0, %v1063
        %v1114 = vsub.f32 0.0, %v1066
        %v1115 = vsub.f32 0.0, %v1071
        %v1116 = vsub.f32 0.0, %v1074
        %v1117 = vsub.f32 0.0, %v1079
        %v1118 = vsub.f32 0.0, %v1082
        %v1119 = vsub.f32 0.0, %v1087
        %v1120 = vsub.f32 0.0, %v1090
        %v1121 = vsub.f32 0.0, %v1095
        %v1122 = vsub.f32 0.0, %v1098
        %v1123 = vsub.f32 0.0, %v1103
        %v1124 = vsub.f32 0.0, %v1106
        %v1125 = vmul.f32 %v1109, 1.442695
        %v1126 = vpow.pop %v1125
        %v1127 = vmul.f32 %v1110, 1.442695
        %v1128 = vpow.pop %v1127
        %v1129 = vmul.f32 %v1111, 1.442695
        %v1130 = vpow.pop %v1129
        %v1131 = vmul.f32 %v1112, 1.442695
        %v1132 = vpow.pop %v1131
        %v1133 = vmul.f32 %v1113, 1.442695
        %v1134 = vpow.pop %v1133
        %v1135 = vmul.f32 %v1114, 1.442695
        %v1136 = vpow.pop %v1135
        %v1137 = vmul.f32 %v1115, 1.442695
        %v1138 = vpow.pop %v1137
        %v1139 = vmul.f32 %v1116, 1.442695
        %v1140 = vpow.pop %v1139
        %v1141 = vmul.f32 %v1117, 1.442695
        %v1142 = vpow.pop %v1141
        %v1143 = vmul.f32 %v1118, 1.442695
        %v1144 = vpow.pop %v1143
        %v1145 = vmul.f32 %v1119, 1.442695
        %v1146 = vpow.pop %v1145
        %v1147 = vmul.f32 %v1120, 1.442695
        %v1148 = vpow.pop %v1147
        %v1149 = vmul.f32 %v1121, 1.442695
        %v1150 = vpow.pop %v1149
        %v1151 = vmul.f32 %v1122, 1.442695
        %v1152 = vpow.pop %v1151
        %v1153 = vmul.f32 %v1123, 1.442695
        %v1154 = vpow.pop %v1153
        %v1155 = vmul.f32 %v1124, 1.442695
        %v1156 = vpow.pop %v1155
        %v1157 = vadd.f32 %v1126, 1.0
        %v1158 = vadd.f32 %v1128, 1.0
        %v1159 = vadd.f32 %v1130, 1.0
        %v1160 = vadd.f32 %v1132, 1.0
        %v1161 = vadd.f32 %v1134, 1.0
        %v1162 = vadd.f32 %v1136, 1.0
        %v1163 = vadd.f32 %v1138, 1.0
        %v1164 = vadd.f32 %v1140, 1.0
        %v1165 = vadd.f32 %v1142, 1.0
        %v1166 = vadd.f32 %v1144, 1.0
        %v1167 = vadd.f32 %v1146, 1.0
        %v1168 = vadd.f32 %v1148, 1.0
        %v1169 = vadd.f32 %v1150, 1.0
        %v1170 = vadd.f32 %v1152, 1.0
        %v1171 = vadd.f32 %v1154, 1.0
        %v1172 = vadd.f32 %v1156, 1.0
        %v1173 = vrcp.pop %v1157
        %v1174 = vrcp.pop %v1158
        %v1175 = vrcp.pop %v1159
        %v1176 = vrcp.pop %v1160
        %v1177 = vrcp.pop %v1161
        %v1178 = vrcp.pop %v1162
        %v1179 = vrcp.pop %v1163
        %v1180 = vrcp.pop %v1164
        %v1181 = vrcp.pop %v1165
        %v1182 = vrcp.pop %v1166
        %v1183 = vrcp.pop %v1167
        %v1184 = vrcp.pop %v1168
        %v1185 = vrcp.pop %v1169
        %v1186 = vrcp.pop %v1170
        %v1187 = vrcp.pop %v1171
        %v1188 = vrcp.pop %v1172
        %s1189 = scalar_lea.vmem %s264, 256 [#allocation6]
        %1190 = vst [vmem:[%s1189] sm:$0xff] %v1173
        %1191 = vst [vmem:[%s1189 + $0x8] sm:$0xff] %v1174
        %1192 = vst [vmem:[%s1189 + $0x10] sm:$0xff] %v1175
        %1193 = vst [vmem:[%s1189 + $0x18] sm:$0xff] %v1176
        %1194 = vst [vmem:[%s1189 + $0x20] sm:$0xff] %v1177
        %1195 = vst [vmem:[%s1189 + $0x28] sm:$0xff] %v1178
        %1196 = vst [vmem:[%s1189 + $0x30] sm:$0xff] %v1179
        %1197 = vst [vmem:[%s1189 + $0x38] sm:$0xff] %v1180
        %1198 = vst [vmem:[%s1189 + $0x40] sm:$0xff] %v1181
        %1199 = vst [vmem:[%s1189 + $0x48] sm:$0xff] %v1182
        %1200 = vst [vmem:[%s1189 + $0x50] sm:$0xff] %v1183
        %1201 = vst [vmem:[%s1189 + $0x58] sm:$0xff] %v1184
        %1202 = vst [vmem:[%s1189 + $0x60] sm:$0xff] %v1185
        %1203 = vst [vmem:[%s1189 + $0x68] sm:$0xff] %v1186
        %1204 = vst [vmem:[%s1189 + $0x70] sm:$0xff] %v1187
        %1205 = vst [vmem:[%s1189 + $0x78] sm:$0xff] %v1188
        %s1206 = sand.u32 %s148, 1
        %s1207 = scalar_lea.sflag [#allocation4], %s1206
        %s1208 = sand.u32 %s148, 1
        %s1209 = smul.addr %s1208, 384
        %s1210 = scalar_lea.vmem [#allocation6], %s1209
        // Predicated region
        $region45: #{tpu_custom_call.1} parent=35 // pred_check
          %p1211 = pneg %p158
        $region46: #{tpu_custom_call.1} parent=35 // pred_check_branch
          %1213 = sbr.rel (%p1211) target = $region48
        $region47: #{tpu_custom_call.1} parent=35 // pred_region
          %s1214 = smul.u32 16, %s25
          %s1216 = ssub.s32 6144, 6144
          %1217 = vsyncadd %s1207, %s1216
          %s1218 = sadd.s32 %s26, %s1214
          %s1219 = smul.addr %s24, 48
          %s1220 = sadd.s32 %s1218, %s1219
          %s1221 = smul.addr %s1220, 128
          %s1222 = scalar_lea.hbm %s4, %s1221
          %s1223 = sshll.u32 %s1210, 4
          %s1224 = int_to_ptr.vmem [resolvable:$true] %s1223
          %1229 = dma.vmem_to_hbm [thread:$0]  %s1224, 6144, %s1222, %s1207, 128, 128, 8
        $region48: #{tpu_custom_call.1} parent=35 // pred_fallthru
          _
      $region36: #{tpu_custom_call.1} parent=5 // pred_fallthru
        _
      %p1230 = scmp.le.s32.totalorder 2, %s14
      // Predicated region
      $region49: #{tpu_custom_call.1} parent=5 // pred_check
        %p1231 = pneg %p1230
      $region50: #{tpu_custom_call.1} parent=5 // pred_check_branch
        %1233 = sbr.rel (%p1231) target = $region52
      $region51: #{tpu_custom_call.1} parent=5 // pred_region
        %s1234 = ssub.s32 %s14, 2
        // Predicated region
        $region53: #{tpu_custom_call.1} parent=51 // pred_check
          %p1235 = pneg %p164
        $region54: #{tpu_custom_call.1} parent=51 // pred_check_branch
          %1237 = sbr.rel (%p1235) target = $region56
        $region55: #{tpu_custom_call.1} parent=51 // pred_region
          %s1238 = sand.u32 %s149, 1
          %s1239 = scalar_lea.sflag [#allocation4], %s1238
          %s1240 = sand.u32 %s149, 1
          %s1241 = smul.addr %s1240, 384
          %s1242 = scalar_lea.vmem [#allocation6], %s1241
          %1243 = dma.done %s1239, 6144
        $region56: #{tpu_custom_call.1} parent=51 // pred_fallthru
          _
      $region52: #{tpu_custom_call.1} parent=5 // pred_fallthru
        _
    $region6: #{tpu_custom_call.1} parent=1 // loop_footer
      %s18 = sadd.s32 1, %s14
    $region7: #{tpu_custom_call.1} parent=1 // loop_footer_branch
      %13 = sbr.rel target = $region3
    $region8: #{tpu_custom_call.1} parent=1 // loop_exit
      _
    %1244 = vsyncpa [#allocation4], 1
    %s1245 = scalar_lea.sflag [#allocation4], 1
    %1246 = vsyncpa %s1245, 1
    %1247 = vsyncpa [#allocation5], 1
    %s1248 = scalar_lea.sflag [#allocation5], 1
    %1249 = vsyncpa %s1248, 1

</llo_original>
